<compile_context>
chip_gen: v7x
topology: tpu7x:2x2x1
jax: 0.10.0
libtpu: 0.0.40
codegen_flags: <defaults>
</compile_context>

<pallas_src>
import functools

import jax
import jax.numpy as jnp
from jax.experimental import pallas as pl
from jax.experimental.pallas import tpu as pltpu


def _rotary_kernel(pos_ref, inv_ref, cos_ref, sin_ref):
    # pos_ref : (1, TS, 1)   float32 — positions (sublane-major)
    # inv_ref : (1, half)    float32 — inverse frequencies (constant per call)
    # cos_ref : (1, TS, dim) out dtype
    # sin_ref : (1, TS, dim) out dtype
    half = inv_ref.shape[1]

    pos = pos_ref[0, :, :]          # (TS, 1)  f32
    inv = inv_ref[...]              # (1, half) f32
    freqs = pos * inv               # (TS, half) outer product via broadcast

    # Transcendentals only on the un-duplicated half; write both output halves.
    c = jnp.cos(freqs).astype(cos_ref.dtype)
    s = jnp.sin(freqs).astype(sin_ref.dtype)
    cos_ref[0, :, 0:half] = c
    cos_ref[0, :, half:] = c
    sin_ref[0, :, 0:half] = s
    sin_ref[0, :, half:] = s
    # TODO(synk): for dim < 128 the per-half stores are masked (lane width < 128);
    # folding multiple heads/tiles into a lane-dense output slab would densify them.


def _pick_seq_tile(seq, dim, out_itemsize):
    """Rows per sequence tile: ~2 MiB per output block, multiple of 8, <= seq."""
    target_bytes = 2 << 20
    rows = max(8, target_bytes // max(1, dim * out_itemsize))
    rows = min(rows, 4096, seq)
    if rows < seq:
        rows = max(8, (rows // 8) * 8)
    return rows


@functools.partial(jax.jit, static_argnames=("dim",))
def dummy_rotary_embedding(x, position_ids, inv_freq, *, dim):
    """Pallas equivalent of DummyRotaryEmbedding.forward.

    x            : any array; only its dtype is used (matches torch semantics)
    position_ids : (batch, seq) integer positions
    inv_freq     : (dim // 2,) float32 inverse frequencies
    returns      : (cos, sin) each of shape (batch, seq, dim), dtype == x.dtype
    """
    if dim % 2 != 0:
        raise ValueError(f"dim must be even, got {dim}")
    half = dim // 2
    if inv_freq.shape[-1] != half:
        raise ValueError(f"inv_freq must have length dim//2={half}, "
                         f"got {inv_freq.shape[-1]}")

    batch, seq = position_ids.shape
    out_dtype = x.dtype

    # Hoisted cast + sublane-major layout for positions.
    pos3d = position_ids.astype(jnp.float32).reshape(batch, seq, 1)
    inv2d = inv_freq.astype(jnp.float32).reshape(1, half)

    ts = _pick_seq_tile(seq, dim, jnp.dtype(out_dtype).itemsize)
    grid = (batch, pl.cdiv(seq, ts))

    out_shape = (
        jax.ShapeDtypeStruct((batch, seq, dim), out_dtype),
        jax.ShapeDtypeStruct((batch, seq, dim), out_dtype),
    )

    cos, sin = pl.pallas_call(
        _rotary_kernel,
        out_shape=out_shape,
        grid_spec=pltpu.PrefetchScalarGridSpec(
            num_scalar_prefetch=0,
            grid=grid,                                       # seq is the inner axis
            in_specs=[
                pl.BlockSpec((1, ts, 1), lambda b, s: (b, s, 0)),
                pl.BlockSpec((1, half), lambda b, s: (0, 0)),  # constant -> no re-DMA
            ],
            out_specs=[
                pl.BlockSpec((1, ts, dim), lambda b, s: (b, s, 0)),
                pl.BlockSpec((1, ts, dim), lambda b, s: (b, s, 0)),
            ],
        ),
        compiler_params=pltpu.CompilerParams(
            dimension_semantics=("parallel", "parallel"),
        ),
    )(pos3d, inv2d)
    return cos, sin


def make_inv_freq(dim, base=10000.0):
    # Matches: 1.0 / base ** (arange(0, dim, 2).float() / dim)
    exponents = jnp.arange(0, dim, 2, dtype=jnp.float32) / float(dim)
    return 1.0 / (float(base) ** exponents)


def _reference(x, position_ids, inv_freq):
    # Pure-JAX reference mirroring the PyTorch forward.
    freqs = position_ids.astype(jnp.float32)[:, :, None] * inv_freq[None, None, :]
    emb = jnp.concatenate([freqs, freqs], axis=-1)
    return jnp.cos(emb).astype(x.dtype), jnp.sin(emb).astype(x.dtype)


if __name__ == "__main__":
    key = jax.random.PRNGKey(0)
    batch, seq, dim = 2, 8, 32
    max_position_embeddings = 2048

    k1, k2 = jax.random.split(key)
    # x only contributes its dtype in the original module.
    x = jax.random.normal(k1, (batch, seq, dim), dtype=jnp.float32)
    position_ids = jax.random.randint(
        k2, (batch, seq), 0, max_position_embeddings, dtype=jnp.int32
    )

    inv_freq = make_inv_freq(dim, base=10000.0)

    cos, sin = dummy_rotary_embedding(x, position_ids, inv_freq, dim=dim)
    cos = jax.block_until_ready(cos)
    sin = jax.block_until_ready(sin)

    ref_cos, ref_sin = _reference(x, position_ids, inv_freq)
    assert cos.shape == (batch, seq, dim) and sin.shape == (batch, seq, dim)
    assert cos.dtype == x.dtype and sin.dtype == x.dtype
    assert jnp.allclose(cos, ref_cos, atol=1e-5, rtol=1e-5)
    assert jnp.allclose(sin, ref_sin, atol=1e-5, rtol=1e-5)

    print("KERNEL_OK")
</pallas_src>

<mosaic_0001>
module attributes {stable_mosaic.version = 11 : i64} {
  func.func @_rotary_kernel(%arg0: i32, %arg1: i32, %arg2: memref<1x8x1xf32, #tpu.memory_space<vmem>>, %arg3: memref<1x16xf32, #tpu.memory_space<vmem>>, %arg4: memref<1x8x32xf32, #tpu.memory_space<vmem>>, %arg5: memref<1x8x32xf32, #tpu.memory_space<vmem>>) attributes {dimension_semantics = [#tpu.dimension_semantics<parallel>, #tpu.dimension_semantics<parallel>], iteration_bounds = array<i64: 2, 1>, scalar_prefetch = 0 : i64, scratch_operands = 0 : i64, tpu.core_type = #tpu.core_type<tc>, window_params = [{transform_indices = @transform_0, window_bounds = array<i64: 1, 8, 1>}, {pipeline_mode = #tpu.pipeline_mode<synchronous>, transform_indices = @transform_1, window_bounds = array<i64: 1, 16>}, {transform_indices = @transform_2, window_bounds = array<i64: 1, 8, 32>}, {transform_indices = @transform_3, window_bounds = array<i64: 1, 8, 32>}]} {
    %c0 = arith.constant 0 : index
    %c0_0 = arith.constant 0 : index
    %c0_1 = arith.constant 0 : index
    %0 = vector.load %arg2[%c0, %c0_0, %c0_1] : memref<1x8x1xf32, #tpu.memory_space<vmem>>, vector<1x8x1xf32>
    %1 = vector.shape_cast %0 : vector<1x8x1xf32> to vector<8x1xf32>
    %c0_2 = arith.constant 0 : index
    %c0_3 = arith.constant 0 : index
    %2 = vector.load %arg3[%c0_2, %c0_3] : memref<1x16xf32, #tpu.memory_space<vmem>>, vector<1x16xf32>
    %3 = vector.broadcast %1 : vector<8x1xf32> to vector<8x16xf32>
    %4 = vector.broadcast %2 : vector<1x16xf32> to vector<8x16xf32>
    %5 = arith.mulf %3, %4 : vector<8x16xf32>
    %6 = math.cos %5 : vector<8x16xf32>
    %7 = math.sin %5 : vector<8x16xf32>
    %c0_4 = arith.constant 0 : index
    %c0_5 = arith.constant 0 : index
    %c0_6 = arith.constant 0 : index
    %8 = vector.load %arg4[%c0_4, %c0_5, %c0_6] : memref<1x8x32xf32, #tpu.memory_space<vmem>>, vector<1x8x16xf32>
    %9 = vector.shape_cast %8 : vector<1x8x16xf32> to vector<8x16xf32>
    %10 = vector.shape_cast %6 : vector<8x16xf32> to vector<1x8x16xf32>
    tpu.vector_store %arg4[%c0_4, %c0_5, %c0_6], %10 {strides = array<i32>} : memref<1x8x32xf32, #tpu.memory_space<vmem>>, vector<1x8x16xf32>,
    %c0_7 = arith.constant 0 : index
    %c0_8 = arith.constant 0 : index
    %c16 = arith.constant 16 : index
    %11 = vector.load %arg4[%c0_7, %c0_8, %c16] : memref<1x8x32xf32, #tpu.memory_space<vmem>>, vector<1x8x16xf32>
    %12 = vector.shape_cast %11 : vector<1x8x16xf32> to vector<8x16xf32>
    %13 = vector.shape_cast %6 : vector<8x16xf32> to vector<1x8x16xf32>
    tpu.vector_store %arg4[%c0_7, %c0_8, %c16], %13 {strides = array<i32>} : memref<1x8x32xf32, #tpu.memory_space<vmem>>, vector<1x8x16xf32>,
    %c0_9 = arith.constant 0 : index
    %c0_10 = arith.constant 0 : index
    %c0_11 = arith.constant 0 : index
    %14 = vector.load %arg5[%c0_9, %c0_10, %c0_11] : memref<1x8x32xf32, #tpu.memory_space<vmem>>, vector<1x8x16xf32>
    %15 = vector.shape_cast %14 : vector<1x8x16xf32> to vector<8x16xf32>
    %16 = vector.shape_cast %7 : vector<8x16xf32> to vector<1x8x16xf32>
    tpu.vector_store %arg5[%c0_9, %c0_10, %c0_11], %16 {strides = array<i32>} : memref<1x8x32xf32, #tpu.memory_space<vmem>>, vector<1x8x16xf32>,
    %c0_12 = arith.constant 0 : index
    %c0_13 = arith.constant 0 : index
    %c16_14 = arith.constant 16 : index
    %17 = vector.load %arg5[%c0_12, %c0_13, %c16_14] : memref<1x8x32xf32, #tpu.memory_space<vmem>>, vector<1x8x16xf32>
    %18 = vector.shape_cast %17 : vector<1x8x16xf32> to vector<8x16xf32>
    %19 = vector.shape_cast %7 : vector<8x16xf32> to vector<1x8x16xf32>
    tpu.vector_store %arg5[%c0_12, %c0_13, %c16_14], %19 {strides = array<i32>} : memref<1x8x32xf32, #tpu.memory_space<vmem>>, vector<1x8x16xf32>,
    return
  }
  func.func @transform_0(%arg0: i32, %arg1: i32) -> (i32, i32, i32) {
    %c0_i32 = arith.constant 0 : i32
    %c0_i32_0 = arith.constant 0 : i32
    return %arg0, %arg1, %c0_i32 : i32, i32, i32
  }
  func.func @transform_1(%arg0: i32, %arg1: i32) -> (i32, i32) {
    %c0_i32 = arith.constant 0 : i32
    %c0_i32_0 = arith.constant 0 : i32
    %c0_i32_1 = arith.constant 0 : i32
    return %c0_i32, %c0_i32_0 : i32, i32
  }
  func.func @transform_2(%arg0: i32, %arg1: i32) -> (i32, i32, i32) {
    %c0_i32 = arith.constant 0 : i32
    %c0_i32_0 = arith.constant 0 : i32
    return %arg0, %arg1, %c0_i32 : i32, i32, i32
  }
  func.func @transform_3(%arg0: i32, %arg1: i32) -> (i32, i32, i32) {
    %c0_i32 = arith.constant 0 : i32
    %c0_i32_0 = arith.constant 0 : i32
    return %arg0, %arg1, %c0_i32 : i32, i32, i32
  }
}

</mosaic_0001>

<llo_original>
// kernel: dummy_rotary_embedding.1
$region0: #{dummy_rotary_embedding.1}
  #allocation0 [shape = 'u32[]', space=smem, size = 0x4, offset = 0x4, fixed_abs, tag = 'smem constant byte address 0x4 - core index']
  #allocation1 [shape = 'u32[144,128]{1,0:T(1,128)}', space=vmem, size = 0x12000, scoped, tag = 'internal scratch']
  %s0 = inlined_call_operand.vmem [shape: f32[2,8,1], index: 0, kind: input, shape index: {}]
  %s1 = inlined_call_operand.vmem [shape: f32[1,16], index: 1, kind: input, shape index: {}]
  %s2 = inlined_call_operand.hbm [shape: f32[2,8,32], index: 2, kind: output, shape index: {0}]
  %s3 = inlined_call_operand.hbm [shape: f32[2,8,32], index: 3, kind: output, shape index: {1}]
  %4 = xla_tuple %s2, %s3
  %s5 = sld [smem:[#allocation0]]
  $region49: #{dummy_rotary_embedding.1} parent=0
    _
  %s7 = ssub.s32 1, %s5
  %s8 = scalar_select 0, %s7, %s5
  $region1: #{dummy_rotary_embedding.1} parent=0
    #allocation2 [shape = 'u8[8192]{0}', space=vmem, size = 0x2000, scoped, tag = 'output window, operand 0']
    #allocation3 [shape = 's32[2]{0}', space=sflag, size = 0x8, scoped, tag = 'scoped memory for dummy_rotary_embedding.1']
    #allocation4 [shape = 'u8[8192]{0}', space=vmem, size = 0x2000, scoped, tag = 'output window, operand 1']
    #allocation5 [shape = 's32[2]{0}', space=sflag, size = 0x8, scoped, tag = 'scoped memory for dummy_rotary_embedding.1']
    %9 = vsyncpa [#allocation3], 0
    %s10 = scalar_lea.sflag [#allocation3], 1
    %11 = vsyncpa %s10, 0
    %12 = vsyncpa [#allocation5], 0
    %s13 = scalar_lea.sflag [#allocation5], 1
    %14 = vsyncpa %s13, 0
    loop: start=0, step=1, limit=4
    $region2: #{dummy_rotary_embedding.1} parent=1 // loop_pre_header
      _
    $region3: #{dummy_rotary_embedding.1} parent=1 // loop_header
      %s16 = sphi 0, %s20
      %p17 = scmp.ge.s32.totalorder %s16, 4
      %s23 = sphi 0, %s35
      %s24 = sphi 0, %s31
      %s25 = sphi 0, %s23
      %s26 = sphi 0, %s24
      %s27 = sphi 0, %s25
      %s28 = sphi 0, %s26
      %s40 = sphi 0, %s42
      %s43 = sphi 0, %s40
      %s44 = sphi 0, %s43
      %s60 = sphi 0, %s44
      %s64 = sphi 0, %s64
      %s66 = sphi 0, %s64
      %s67 = sphi 0, %s66
      %s81 = sphi 0, %s67
      %s89 = sphi 0, %s91
      %s92 = sphi 0, %s89
      %s93 = sphi 0, %s92
      %s109 = sphi 0, %s93
      %s117 = sphi 0, %s119
      %s120 = sphi 0, %s117
      %s121 = sphi 0, %s120
      %s137 = sphi 0, %s121
    $region4: #{dummy_rotary_embedding.1} parent=1 // loop_header_branch
      %19 = sbr.rel (%p17) target = $region8
    $region5: #{dummy_rotary_embedding.1} parent=1 // loop_body
      %s21 = ssub.s32 %s16, 1
      %s22 = ssub.s32 %s16, 2
      %s29 = sadd.s32 1, %s24
      %p30 = scmp.ge.s32.totalorder %s29, 1
      %s31 = scalar_select %p30, 0, %s29
      %s32 = sadd.s32 1, %s23
      %s33 = scalar_select %p30, %s32, %s23
      %p34 = scmp.ge.s32.totalorder %s33, 2
      %s35 = scalar_select %p34, 0, %s33
      %s36 = ssub.s32 %s23, %s35
      %s37 = ssub.s32 %s24, %s31
      %s38 = sor.u32 %s36, %s37
      %p39 = scmp.eq.s32.totalorder %s38, 0
      %s41 = sadd.s32 %s40, 1
      %s42 = scalar_select %p39, %s40, %s41
      %p45 = pneg %p39
      %p46 = scmp.eq.s32.totalorder %s16, 1
      %p47 = por %p45, %p46
      %p48 = scmp.ne.s32.totalorder %s40, %s43
      %p49 = scmp.eq.s32.totalorder %s16, 0
      %p50 = por %p48, %p49
      %p51 = scmp.ne.s32.totalorder %s40, %s43
      %p52 = scmp.eq.s32.totalorder %s21, 1
      %p53 = por %p51, %p52
      %p54 = scmp.ne.s32.totalorder %s43, %s44
      %p55 = scmp.eq.s32.totalorder %s21, 0
      %p56 = por %p54, %p55
      %p57 = scmp.ne.s32.totalorder %s43, %s44
      %p58 = scmp.eq.s32.totalorder %s22, 1
      %p59 = por %p57, %p58
      %p61 = scmp.ne.s32.totalorder %s44, %s60
      %p62 = scmp.eq.s32.totalorder %s22, 0
      %p63 = por %p61, %p62
      %s65 = sadd.s32 %s64, 1
      %p68 = scmp.eq.s32.totalorder %s16, 1
      %p69 = scmp.ne.s32.totalorder %s64, %s66
      %p70 = scmp.eq.s32.totalorder %s16, 0
      %p71 = por %p69, %p70
      %p72 = scmp.ne.s32.totalorder %s64, %s66
      %p73 = scmp.eq.s32.totalorder %s21, 1
      %p74 = por %p72, %p73
      %p75 = scmp.ne.s32.totalorder %s66, %s67
      %p76 = scmp.eq.s32.totalorder %s21, 0
      %p77 = por %p75, %p76
      %p78 = scmp.ne.s32.totalorder %s66, %s67
      %p79 = scmp.eq.s32.totalorder %s22, 1
      %p80 = por %p78, %p79
      %p82 = scmp.ne.s32.totalorder %s67, %s81
      %p83 = scmp.eq.s32.totalorder %s22, 0
      %p84 = por %p82, %p83
      %s85 = ssub.s32 %s23, %s35
      %s86 = ssub.s32 %s24, %s31
      %s87 = sor.u32 %s85, %s86
      %p88 = scmp.eq.s32.totalorder %s87, 0
      %s90 = sadd.s32 %s89, 1
      %s91 = scalar_select %p88, %s89, %s90
      %p94 = pneg %p88
      %p95 = scmp.eq.s32.totalorder %s16, 1
      %p96 = por %p94, %p95
      %p97 = scmp.ne.s32.totalorder %s89, %s92
      %p98 = scmp.eq.s32.totalorder %s16, 0
      %p99 = por %p97, %p98
      %p100 = scmp.ne.s32.totalorder %s89, %s92
      %p101 = scmp.eq.s32.totalorder %s21, 1
      %p102 = por %p100, %p101
      %p103 = scmp.ne.s32.totalorder %s92, %s93
      %p104 = scmp.eq.s32.totalorder %s21, 0
      %p105 = por %p103, %p104
      %p106 = scmp.ne.s32.totalorder %s92, %s93
      %p107 = scmp.eq.s32.totalorder %s22, 1
      %p108 = por %p106, %p107
      %p110 = scmp.ne.s32.totalorder %s93, %s109
      %p111 = scmp.eq.s32.totalorder %s22, 0
      %p112 = por %p110, %p111
      %s113 = ssub.s32 %s23, %s35
      %s114 = ssub.s32 %s24, %s31
      %s115 = sor.u32 %s113, %s114
      %p116 = scmp.eq.s32.totalorder %s115, 0
      %s118 = sadd.s32 %s117, 1
      %s119 = scalar_select %p116, %s117, %s118
      %p122 = pneg %p116
      %p123 = scmp.eq.s32.totalorder %s16, 1
      %p124 = por %p122, %p123
      %p125 = scmp.ne.s32.totalorder %s117, %s120
      %p126 = scmp.eq.s32.totalorder %s16, 0
      %p127 = por %p125, %p126
      %p128 = scmp.ne.s32.totalorder %s117, %s120
      %p129 = scmp.eq.s32.totalorder %s21, 1
      %p130 = por %p128, %p129
      %p131 = scmp.ne.s32.totalorder %s120, %s121
      %p132 = scmp.eq.s32.totalorder %s21, 0
      %p133 = por %p131, %p132
      %p134 = scmp.ne.s32.totalorder %s120, %s121
      %p135 = scmp.eq.s32.totalorder %s22, 1
      %p136 = por %p134, %p135
      %p138 = scmp.ne.s32.totalorder %s121, %s137
      %p139 = scmp.eq.s32.totalorder %s22, 0
      %p140 = por %p138, %p139
      %p141 = scmp.le.s32.totalorder 1, %s16
      %p142 = scmp.lt.s32.totalorder %s16, 3
      %p143 = pnand %p141, %p142
      %p144 = pneg %p143
      // Predicated region
      $region9: #{dummy_rotary_embedding.1} parent=5 // pred_check
        _
      $region10: #{dummy_rotary_embedding.1} parent=5 // pred_check_branch
        %146 = sbr.rel (%p143) target = $region12
      $region11: #{dummy_rotary_embedding.1} parent=5 // pred_region
        %s147 = ssub.s32 %s16, 1
        // Predicated region
        $region13: #{dummy_rotary_embedding.1} parent=11 // pred_check
          %p148 = pneg %p77
        $region14: #{dummy_rotary_embedding.1} parent=11 // pred_check_branch
          %150 = sbr.rel (%p148) target = $region16
        $region15: #{dummy_rotary_embedding.1} parent=11 // pred_region
          _
        $region16: #{dummy_rotary_embedding.1} parent=11 // pred_fallthru
          _
      $region12: #{dummy_rotary_embedding.1} parent=5 // pred_fallthru
        _
      %p151 = scmp.lt.s32.totalorder %s16, 2
      // Predicated region
      $region17: #{dummy_rotary_embedding.1} parent=5 // pred_check
        %p152 = pneg %p151
      $region18: #{dummy_rotary_embedding.1} parent=5 // pred_check_branch
        %154 = sbr.rel (%p152) target = $region20
      $region19: #{dummy_rotary_embedding.1} parent=5 // pred_region
        // Predicated region
        $region21: #{dummy_rotary_embedding.1} parent=19 // pred_check
          %p155 = pneg %p50
        $region22: #{dummy_rotary_embedding.1} parent=19 // pred_check_branch
          %157 = sbr.rel (%p155) target = $region24
        $region23: #{dummy_rotary_embedding.1} parent=19 // pred_region
          %p158 = scmp.lt.s32.totalorder %s23, 1
          %s159 = scalar_select %p158, %s23, 1
          %p160 = scmp.lt.s32.totalorder %s24, 0
          %s161 = scalar_select %p160, %s24, 0
          %s162 = sadd.s32 %s161, %s159
          %s163 = smul.addr %s162, 8
          %s164 = scalar_lea.vmem %s0, %s163
        $region24: #{dummy_rotary_embedding.1} parent=19 // pred_fallthru
          _
      $region20: #{dummy_rotary_embedding.1} parent=5 // pred_fallthru
        _
      %p165 = scmp.le.s32.totalorder 1, %s16
      %p166 = scmp.lt.s32.totalorder %s16, 3
      %p167 = pnand %p165, %p166
      %p168 = pneg %p167
      // Predicated region
      $region25: #{dummy_rotary_embedding.1} parent=5 // pred_check
        _
      $region26: #{dummy_rotary_embedding.1} parent=5 // pred_check_branch
        %170 = sbr.rel (%p167) target = $region28
      $region27: #{dummy_rotary_embedding.1} parent=5 // pred_region
        %s171 = ssub.s32 %s16, 1
        %p172 = scmp.lt.s32.totalorder %s25, 1
        %s173 = scalar_select %p172, %s25, 1
        %p174 = scmp.lt.s32.totalorder %s26, 0
        %s175 = scalar_select %p174, %s26, 0
        %s176 = sadd.s32 %s175, %s173
        %s177 = smul.addr %s176, 8
        %s178 = scalar_lea.vmem %s0, %s177
        %p179 = pneg %p56
        %p180 = pneg %p53
        %p181 = pneg %p77
        %p182 = pneg %p74
        %p183 = pneg %p105
        %p184 = pneg %p102
        %s185 = sand.u32 %s92, 1
        %s186 = scalar_lea.sflag [#allocation3], %s185
        %s187 = sand.u32 %s92, 1
        %s188 = smul.addr %s187, 8
        %s189 = scalar_lea.vmem [#allocation2], %s188
        %p190 = pneg %p133
        %p191 = pneg %p130
        %s192 = sand.u32 %s120, 1
        %s193 = scalar_lea.sflag [#allocation5], %s192
        %s194 = sand.u32 %s120, 1
        %s195 = smul.addr %s194, 8
        %s196 = scalar_lea.vmem [#allocation4], %s195
        %p197 = scmp.lt.s32.totalorder %s25, 1
        %s198 = scalar_select %p197, %s25, 1
        %p199 = scmp.lt.s32.totalorder %s26, 0
        %s200 = scalar_select %p199, %s26, 0
        %s201 = sadd.s32 %s200, %s198
        %s202 = smul.addr %s201, 8
        %s203 = scalar_lea.vmem %s0, %s202
        %v204 = vld [vmem:[%s203] sm:$0xff]
        %v205 = vld [vmem:[%s1] sm:$0x1]
        %207 = vset.pattern.permute.xlu0 0
        %208 = vperm.xlu0 %207, %v204
        %v209 = vpop.permute.xlu0 %208
        %v212 = vlaneseq
        %v213 = vshrl.u32 %v212, 7
        %v214 = vsub.s32 0, %v213
        %v215 = vrot.slane %v205, %v214
        %v217 = vmul.f32 %v209, %v215
        %v218 = vand.u32 2147483647, %v217
        %vm219 = vcmp.le.f32.partialorder %v218, 0.7853982
        %vm220 = vcmp.lt.s32.totalorder %v217, 0
        %v221 = vand.u32 %v217, 2139095040
        %v222 = vshrl.u32 %v221, 23
        %v223 = vsub.s32 %v222, 127
        %v224 = vand.u32 2147483647, %v217
        %v225 = vand.u32 %v224, 8388607
        %v226 = vor.u32 %v225, 8388608
        %v227 = vsub.s32 0, %v226
        %v228 = vadd.s32 %v223, 1
        %vm229 = vcmp.gt.s32.totalorder %v228, 0
        %v230 = vsel %vm229, %v228, 0
        %v231 = vshrl.u32 %v230, 5
        %v232 = vand.u32 %v230, 31
        %v233 = vsub.s32 32, %v232
        %v234 = vshrl.u32 683565275, %v233
        %v235 = vshll.u32 683565275, %v232
        %v236 = vshrl.u32 2475754826, %v233
        %v237 = vor.u32 %v235, %v236
        %v238 = vshll.u32 2475754826, %v232
        %v239 = vshrl.u32 2131351028, %v233
        %v240 = vor.u32 %v238, %v239
        %v241 = vshll.u32 2131351028, %v232
        %v242 = vshrl.u32 2102212464, %v233
        %v243 = vor.u32 %v241, %v242
        %v244 = vshll.u32 2102212464, %v232
        %v245 = vshrl.u32 920167782, %v233
        %v246 = vor.u32 %v244, %v245
        %v247 = vshll.u32 920167782, %v232
        %v248 = vshrl.u32 1326507024, %v233
        %v249 = vor.u32 %v247, %v248
        %vm250 = vcmp.lt.s32.totalorder %v231, 1
        %vm251 = vcmp.lt.s32.totalorder %v231, 2
        %vm252 = vcmp.lt.s32.totalorder %v231, 3
        %vm253 = vcmp.lt.s32.totalorder %v231, 4
        %v254 = vsel %vm250, %v234, %v237
        %v255 = vsel %vm253, %v243, 2102212464
        %v256 = vsel %vm252, %v240, %v255
        %v257 = vsel %vm251, %v254, %v256
        %v258 = vsel %vm250, %v237, %v240
        %v259 = vsel %vm253, %v246, 920167782
        %v260 = vsel %vm252, %v243, %v259
        %v261 = vsel %vm251, %v258, %v260
        %v262 = vsel %vm250, %v240, %v243
        %v263 = vsel %vm253, %v249, 1326507024
        %v264 = vsel %vm252, %v246, %v263
        %v265 = vsel %vm251, %v262, %v264
        %v266 = vshll.u32 %v226, 8
        %v267 = vmul.u32.u64.compose %v266, %v265
        %v268 = vextract.low.u32 %v267
        %v269 = vextract.high.u32 %v267
        %v270 = vmul.u32.u64.compose %v266, %v261
        %v271 = vextract.low.u32 %v270
        %v272 = vextract.high.u32 %v270
        %v273 = vmul.u32 %v266, %v257
        %v274 = vadd.s32 %v269, %v271
        %vm275 = vc.u32 %v269, %v271
        %v276 = vadd.s32 %v272, 1
        %v277 = vsel %vm275, %v276, %v272
        %v278 = vadd.s32 %v273, %v277
        %v279 = vadd.s32 %v278, 536870912
        %v280 = vshrl.u32 %v279, 30
        %v281 = vshll.u32 %v280, 30
        %v282 = vsub.s32 %v278, %v281
        %vm283 = vcmp.lt.s32.totalorder %v282, 0
        %v284 = vsub.s32 0, %v282
        %v285 = vsel %vm283, %v284, %v282
        %v286 = vclz %v285
        %v287 = vsub.s32 %v286, 2
        %vm288 = vcmp.gt.s32.totalorder 0, %v287
        %v289 = vsel %vm288, 0, %v287
        %v290 = vsub.s32 32, %v289
        %v291 = vshll.u32 %v282, %v289
        %v292 = vshrl.u32 %v274, %v290
        %v293 = vor.u32 %v291, %v292
        %v294 = vsub.s32 4294967266, %v289
        %v295 = vadd.s32 %v294, 127
        %v296 = vshll.u32 %v295, 23
        %v297 = vor.u32 4788187, %v296
        %v298 = vand.u32 2147483647, %v297
        %v300 = vcvt.s32.f32 %v293
        %v301 = vmul.f32 %v300, %v298
        %v302 = vxor.u32 %v301, 2147483648
        %v303 = vsel %vm220, %v302, %v301
        %v304 = vsub.s32 4, %v280
        %v305 = vsel %vm220, %v304, %v280
        %v306 = vsel %vm219, %v217, %v303
        %v307 = vsel %vm219, 0, %v305
        %v308 = vcosq.f32.pop %v306
        %v309 = vsinq.f32.pop %v306
        %vm310 = vweird.f32 %v217
        %v311 = vand.u32 %v307, 3
        %vm312 = vcmp.lt.s32.totalorder %v311, 2
        %vm313 = vcmp.eq.s32.totalorder %v311, 0
        %v314 = vxor.u32 %v309, 2147483648
        %v315 = vsel %vm313, %v308, %v314
        %vm316 = vcmp.eq.s32.totalorder %v311, 2
        %v317 = vxor.u32 %v308, 2147483648
        %v318 = vsel %vm316, %v317, %v309
        %v319 = vsel %vm312, %v315, %v318
        %v320 = vsel %vm310, nan, %v319
        %v321 = vand.u32 2147483647, %v217
        %vm322 = vcmp.le.f32.partialorder %v321, 0.7853982
        %vm323 = vcmp.lt.s32.totalorder %v217, 0
        %v324 = vand.u32 %v217, 2139095040
        %v325 = vshrl.u32 %v324, 23
        %v326 = vsub.s32 %v325, 127
        %v327 = vand.u32 2147483647, %v217
        %v328 = vand.u32 %v327, 8388607
        %v329 = vor.u32 %v328, 8388608
        %v330 = vsub.s32 0, %v329
        %v331 = vadd.s32 %v326, 1
        %vm332 = vcmp.gt.s32.totalorder %v331, 0
        %v333 = vsel %vm332, %v331, 0
        %v334 = vshrl.u32 %v333, 5
        %v335 = vand.u32 %v333, 31
        %v336 = vsub.s32 32, %v335
        %v337 = vshrl.u32 683565275, %v336
        %v338 = vshll.u32 683565275, %v335
        %v339 = vshrl.u32 2475754826, %v336
        %v340 = vor.u32 %v338, %v339
        %v341 = vshll.u32 2475754826, %v335
        %v342 = vshrl.u32 2131351028, %v336
        %v343 = vor.u32 %v341, %v342
        %v344 = vshll.u32 2131351028, %v335
        %v345 = vshrl.u32 2102212464, %v336
        %v346 = vor.u32 %v344, %v345
        %v347 = vshll.u32 2102212464, %v335
        %v348 = vshrl.u32 920167782, %v336
        %v349 = vor.u32 %v347, %v348
        %v350 = vshll.u32 920167782, %v335
        %v351 = vshrl.u32 1326507024, %v336
        %v352 = vor.u32 %v350, %v351
        %vm353 = vcmp.lt.s32.totalorder %v334, 1
        %vm354 = vcmp.lt.s32.totalorder %v334, 2
        %vm355 = vcmp.lt.s32.totalorder %v334, 3
        %vm356 = vcmp.lt.s32.totalorder %v334, 4
        %v357 = vsel %vm353, %v337, %v340
        %v358 = vsel %vm356, %v346, 2102212464
        %v359 = vsel %vm355, %v343, %v358
        %v360 = vsel %vm354, %v357, %v359
        %v361 = vsel %vm353, %v340, %v343
        %v362 = vsel %vm356, %v349, 920167782
        %v363 = vsel %vm355, %v346, %v362
        %v364 = vsel %vm354, %v361, %v363
        %v365 = vsel %vm353, %v343, %v346
        %v366 = vsel %vm356, %v352, 1326507024
        %v367 = vsel %vm355, %v349, %v366
        %v368 = vsel %vm354, %v365, %v367
        %v369 = vshll.u32 %v329, 8
        %v370 = vmul.u32.u64.compose %v369, %v368
        %v371 = vextract.low.u32 %v370
        %v372 = vextract.high.u32 %v370
        %v373 = vmul.u32.u64.compose %v369, %v364
        %v374 = vextract.low.u32 %v373
        %v375 = vextract.high.u32 %v373
        %v376 = vmul.u32 %v369, %v360
        %v377 = vadd.s32 %v372, %v374
        %vm378 = vc.u32 %v372, %v374
        %v379 = vadd.s32 %v375, 1
        %v380 = vsel %vm378, %v379, %v375
        %v381 = vadd.s32 %v376, %v380
        %v382 = vadd.s32 %v381, 536870912
        %v383 = vshrl.u32 %v382, 30
        %v384 = vshll.u32 %v383, 30
        %v385 = vsub.s32 %v381, %v384
        %vm386 = vcmp.lt.s32.totalorder %v385, 0
        %v387 = vsub.s32 0, %v385
        %v388 = vsel %vm386, %v387, %v385
        %v389 = vclz %v388
        %v390 = vsub.s32 %v389, 2
        %vm391 = vcmp.gt.s32.totalorder 0, %v390
        %v392 = vsel %vm391, 0, %v390
        %v393 = vsub.s32 32, %v392
        %v394 = vshll.u32 %v385, %v392
        %v395 = vshrl.u32 %v377, %v393
        %v396 = vor.u32 %v394, %v395
        %v397 = vsub.s32 4294967266, %v392
        %v398 = vadd.s32 %v397, 127
        %v399 = vshll.u32 %v398, 23
        %v400 = vor.u32 4788187, %v399
        %v401 = vand.u32 2147483647, %v400
        %v403 = vcvt.s32.f32 %v396
        %v404 = vmul.f32 %v403, %v401
        %v405 = vxor.u32 %v404, 2147483648
        %v406 = vsel %vm323, %v405, %v404
        %v407 = vsub.s32 4, %v383
        %v408 = vsel %vm323, %v407, %v383
        %v409 = vsel %vm322, %v217, %v406
        %v410 = vsel %vm322, 0, %v408
        %v411 = vcosq.f32.pop %v409
        %v412 = vsinq.f32.pop %v409
        %vm413 = vweird.f32 %v217
        %v414 = vadd.s32 %v410, 3
        %v415 = vand.u32 %v414, 3
        %vm416 = vcmp.lt.s32.totalorder %v415, 2
        %vm417 = vcmp.eq.s32.totalorder %v415, 0
        %v418 = vxor.u32 %v412, 2147483648
        %v419 = vsel %vm417, %v411, %v418
        %vm420 = vcmp.eq.s32.totalorder %v415, 2
        %v421 = vxor.u32 %v411, 2147483648
        %v422 = vsel %vm420, %v421, %v412
        %v423 = vsel %vm416, %v419, %v422
        %v424 = vsel %vm413, nan, %v423
        %vm425 = vcmask 130048
        %426 = vst.msk [vmem:[%s189] sm:$0xff] %vm425, %v320
        %428 = vrot.lane.b32.xlu0 %v320, 16
        %v429 = vpop.permute.xlu0 %428
        %vm431 = vcmask 261248
        %432 = vst.msk [vmem:[%s189] sm:$0xff] %vm431, %v429
        %433 = vst.msk [vmem:[%s196] sm:$0xff] %vm425, %v424
        %435 = vrot.lane.b32.xlu0 %v424, 16
        %v436 = vpop.permute.xlu0 %435
        %438 = vst.msk [vmem:[%s196] sm:$0xff] %vm431, %v436
        %s439 = sand.u32 %s92, 1
        %s440 = scalar_lea.sflag [#allocation3], %s439
        %s441 = sand.u32 %s92, 1
        %s442 = smul.addr %s441, 8
        %s443 = scalar_lea.vmem [#allocation2], %s442
        %s444 = sand.u32 %s120, 1
        %s445 = scalar_lea.sflag [#allocation5], %s444
        %s446 = sand.u32 %s120, 1
        %s447 = smul.addr %s446, 8
        %s448 = scalar_lea.vmem [#allocation4], %s447
        // Predicated region
        $region29: #{dummy_rotary_embedding.1} parent=27 // pred_check
          %p449 = pneg %p102
        $region30: #{dummy_rotary_embedding.1} parent=27 // pred_check_branch
          %451 = sbr.rel (%p449) target = $region32
        $region31: #{dummy_rotary_embedding.1} parent=27 // pred_region
          %s453 = ssub.s32 128, 128
          %454 = vsyncadd %s440, %s453
          %s455 = sadd.s32 %s26, %s25
          %s456 = smul.addr %s455, 128
          %s457 = scalar_lea.hbm %s2, %s456
          %s459 = sshll.u32 %s443, 4
          %s460 = int_to_ptr.vmem [resolvable:$true] %s459
          %462 = dma.vmem_to_hbm [thread:$0]  %s460, 128, %s457, %s440
        $region32: #{dummy_rotary_embedding.1} parent=27 // pred_fallthru
          _
        // Predicated region
        $region33: #{dummy_rotary_embedding.1} parent=27 // pred_check
          %p463 = pneg %p130
        $region34: #{dummy_rotary_embedding.1} parent=27 // pred_check_branch
          %465 = sbr.rel (%p463) target = $region36
        $region35: #{dummy_rotary_embedding.1} parent=27 // pred_region
          %s467 = ssub.s32 128, 128
          %468 = vsyncadd %s445, %s467
          %s469 = sadd.s32 %s26, %s25
          %s470 = smul.addr %s469, 128
          %s471 = scalar_lea.hbm %s3, %s470
          %s473 = sshll.u32 %s448, 4
          %s474 = int_to_ptr.vmem [resolvable:$true] %s473
          %476 = dma.vmem_to_hbm [thread:$0]  %s474, 128, %s471, %s445
        $region36: #{dummy_rotary_embedding.1} parent=27 // pred_fallthru
          _
      $region28: #{dummy_rotary_embedding.1} parent=5 // pred_fallthru
        _
      %p477 = scmp.le.s32.totalorder 2, %s16
      // Predicated region
      $region37: #{dummy_rotary_embedding.1} parent=5 // pred_check
        %p478 = pneg %p477
      $region38: #{dummy_rotary_embedding.1} parent=5 // pred_check_branch
        %480 = sbr.rel (%p478) target = $region40
      $region39: #{dummy_rotary_embedding.1} parent=5 // pred_region
        %s481 = ssub.s32 %s16, 2
        // Predicated region
        $region41: #{dummy_rotary_embedding.1} parent=39 // pred_check
          %p482 = pneg %p108
        $region42: #{dummy_rotary_embedding.1} parent=39 // pred_check_branch
          %484 = sbr.rel (%p482) target = $region44
        $region43: #{dummy_rotary_embedding.1} parent=39 // pred_region
          %s485 = sand.u32 %s93, 1
          %s486 = scalar_lea.sflag [#allocation3], %s485
          %s487 = sand.u32 %s93, 1
          %s488 = smul.addr %s487, 8
          %s489 = scalar_lea.vmem [#allocation2], %s488
          %490 = dma.done %s486, 128
        $region44: #{dummy_rotary_embedding.1} parent=39 // pred_fallthru
          _
        // Predicated region
        $region45: #{dummy_rotary_embedding.1} parent=39 // pred_check
          %p491 = pneg %p136
        $region46: #{dummy_rotary_embedding.1} parent=39 // pred_check_branch
          %493 = sbr.rel (%p491) target = $region48
        $region47: #{dummy_rotary_embedding.1} parent=39 // pred_region
          %s494 = sand.u32 %s121, 1
          %s495 = scalar_lea.sflag [#allocation5], %s494
          %s496 = sand.u32 %s121, 1
          %s497 = smul.addr %s496, 8
          %s498 = scalar_lea.vmem [#allocation4], %s497
          %499 = dma.done %s495, 128
        $region48: #{dummy_rotary_embedding.1} parent=39 // pred_fallthru
          _
      $region40: #{dummy_rotary_embedding.1} parent=5 // pred_fallthru
        _
    $region6: #{dummy_rotary_embedding.1} parent=1 // loop_footer
      %s20 = sadd.s32 1, %s16
    $region7: #{dummy_rotary_embedding.1} parent=1 // loop_footer_branch
      %15 = sbr.rel target = $region3
    $region8: #{dummy_rotary_embedding.1} parent=1 // loop_exit
      _
    %500 = vsyncpa [#allocation3], 1
    %s501 = scalar_lea.sflag [#allocation3], 1
    %502 = vsyncpa %s501, 1
    %503 = vsyncpa [#allocation5], 1
    %s504 = scalar_lea.sflag [#allocation5], 1
    %505 = vsyncpa %s504, 1

</llo_original>
